<compile_context>
chip_gen: v7x
topology: tpu7x:2x2x1
jax: 0.10.0
libtpu: 0.0.40
codegen_flags: <defaults>
</compile_context>

<pallas_src>
import math

import numpy as np
import jax
import jax.numpy as jnp
from jax.experimental import pallas as pl
from jax.experimental.pallas import tpu as pltpu

# ----------------------------- sizes ---------------------------------------
B        = 16                        # batch
N_CAT    = 4                         # number of categorical features
EMB_DIM  = 32                        # emb_dim
EMB_FREE = EMB_DIM - EMB_DIM // 8    # 28: per-feature embedding width
EMB_SHRD = EMB_DIM // 8              # 4 : shared embedding width
N_CONT   = 16                        # number of continuous features
HIDDEN   = 64                        # encoder latent size
HPAD     = 128                       # lane-padded hidden width
FLAT     = N_CAT * EMB_DIM           # 128: flattened attention width
IN_PAD   = 256                       # lane-dense padded input width
QKV      = 3 * FLAT                  # 384
W1_COLS  = QKV + HPAD                # 512
OUT_DIM  = FLAT + N_CONT             # 144: decoder reconstructs the target
OUT_PAD  = 256                       # lane-dense padded output width
ONES_LANE = FLAT + N_CONT            # 144: constant-1 lane in the input slab
CARDINALITIES = [10, 7, 5, 12]       # categorical vocabulary sizes


# ----------------------------- kernel ---------------------------------------
def attention_ae_kernel(x_ref, w1_ref, w2_ref, w3_ref, o_ref):
    # Fused first matmul: QKV projection (block-diag, q pre-scaled) AND the
    # continuous-feature encoder contribution + encoder bias, one K=256 pass.
    x = x_ref[...]                                                   # (B,256) bf16
    y = jnp.dot(x, w1_ref[...],
                preferred_element_type=jnp.float32)                  # (B,512) f32
    q = y[:, 0:FLAT]                                                 # already * 1/sqrt(d)
    k = y[:, FLAT:2 * FLAT]
    v = y[:, 2 * FLAT:3 * FLAT]
    h_cont = y[:, QKV:QKV + HPAD]       # (B,128): x_cont@W_enc_cont + b_enc; lane 64 == 1.0

    qs = [q[:, EMB_DIM * c:EMB_DIM * (c + 1)] for c in range(N_CAT)]  # 4 x (B,32)
    ks = [k[:, EMB_DIM * d:EMB_DIM * (d + 1)] for d in range(N_CAT)]
    vs = [v[:, EMB_DIM * d:EMB_DIM * (d + 1)] for d in range(N_CAT)]

    # Unrolled 4x4 scaled-dot-product attention on the VPU/XLU/EUP (broadcast
    # multiply + lane reduce); softmax stays f32, EUP approximate reciprocal.
    attn_blocks = []
    for c in range(N_CAT):
        s_c = [jnp.sum(qs[c] * ks[d], axis=-1, keepdims=True)
               for d in range(N_CAT)]                                # 4 x (B,1)
        m = s_c[0]
        for d in range(1, N_CAT):
            m = jnp.maximum(m, s_c[d])
        e = [jnp.exp(s - m) for s in s_c]
        denom = e[0]
        for d in range(1, N_CAT):
            denom = denom + e[d]
        inv = pl.reciprocal(denom, approx=True)                      # EUP vrcp
        acc = (e[0] * inv) * vs[0]
        for d in range(1, N_CAT):
            acc = acc + (e[d] * inv) * vs[d]
        attn_blocks.append(acc)                                      # (B,32) f32
    attn = jnp.concatenate(attn_blocks, axis=-1)                     # (B,128) f32

    # Encoder (attention part) + ReLU.  h_cont already carries the continuous
    # contribution, the encoder bias, and a constant 1.0 in lane HIDDEN (used
    # below to apply the decoder bias through the decoder matmul).
    h = jnp.dot(attn.astype(jnp.bfloat16), w2_ref[...],
                preferred_element_type=jnp.float32)                  # (B,128)
    h = jnp.maximum(h + h_cont, 0.0)

    # Decoder: K=128 lane-dense matmul into a 256-lane padded output
    # (unmasked stores); row HIDDEN of w3 is the decoder bias.
    out = jnp.dot(h.astype(jnp.bfloat16), w3_ref[...],
                  preferred_element_type=jnp.float32)                # (B,256)
    o_ref[...] = out.astype(o_ref.dtype)


# ----------------------------- weight packing (runs ONCE) -------------------
def pack_params(wq, wk, wv, w_enc, b_enc, w_dec, b_dec):
    """Pre-pack module parameters into the three bf16 slabs the kernel needs.

    Called once at parameter-init time, NOT per forward call.
    """
    scale = 1.0 / math.sqrt(EMB_DIM)
    eye = jnp.eye(N_CAT, dtype=jnp.float32)
    blk = lambda w: jnp.kron(eye, w)                                 # (128,128) block-diag
    w_qkv = jnp.concatenate([blk(wq * scale), blk(wk), blk(wv)], axis=1)  # (128,384)

    # W1: (256, 512) = [[w_qkv, 0], [0, w_enc_cont]] + bias row via ones-lane.
    w1 = jnp.zeros((IN_PAD, W1_COLS), jnp.float32)
    w1 = w1.at[:FLAT, :QKV].set(w_qkv)
    w1 = w1.at[FLAT:FLAT + N_CONT, QKV:QKV + HIDDEN].set(w_enc[FLAT:])
    w1 = w1.at[ONES_LANE, QKV:QKV + HIDDEN].set(b_enc[0])
    w1 = w1.at[ONES_LANE, QKV + HIDDEN].set(1.0)   # -> constant 1.0 in hidden lane 64

    # W2: (128, 128) encoder weights for the attention part (hidden padded).
    w2 = jnp.zeros((FLAT, HPAD), jnp.float32)
    w2 = w2.at[:, :HIDDEN].set(w_enc[:FLAT])

    # W3: (128, 256) decoder weights, row HIDDEN = decoder bias.
    w3 = jnp.zeros((HPAD, OUT_PAD), jnp.float32)
    w3 = w3.at[:HIDDEN, :OUT_DIM].set(w_dec)
    w3 = w3.at[HIDDEN, :OUT_DIM].set(b_dec[0])

    return (w1.astype(jnp.bfloat16),
            w2.astype(jnp.bfloat16),
            w3.astype(jnp.bfloat16))


# ----------------------------- jitted forward -------------------------------
@jax.jit
def attention_ae_forward(x_cat, x_cont, emb_tables, shared_embedding,
                         w1, w2, w3):
    """x_cat: (B, N_CAT) int32; x_cont: (B, N_CONT) f32; w1/w2/w3 pre-packed."""
    b = x_cat.shape[0]

    # Embedding gathers + shared-embedding concat (JAX glue, same jit).
    per_feat = [emb_tables[i][x_cat[:, i]] for i in range(N_CAT)]    # each (B,28)
    x_emb = jnp.stack(per_feat, axis=1)                              # (B,4,28)
    shared = jnp.broadcast_to(shared_embedding[None], (b, N_CAT, EMB_SHRD))
    x_emb = jnp.concatenate([x_emb, shared], axis=2)                 # (B,4,32)

    # One lane-dense (B,256) bf16 input slab: [emb | x_cont | 1 | 0-pad].
    x_in = jnp.zeros((b, IN_PAD), jnp.bfloat16)
    x_in = x_in.at[:, :FLAT].set(x_emb.reshape(b, FLAT).astype(jnp.bfloat16))
    x_in = x_in.at[:, FLAT:FLAT + N_CONT].set(x_cont.astype(jnp.bfloat16))
    x_in = x_in.at[:, ONES_LANE].set(jnp.bfloat16(1.0))

    vmem = pl.BlockSpec(memory_space=pltpu.MemorySpace.VMEM)
    out_pad = pl.pallas_call(
        attention_ae_kernel,
        out_shape=jax.ShapeDtypeStruct((b, OUT_PAD), jnp.float32),
        in_specs=[vmem] * 4,
        out_specs=vmem,
        # Grid-less: total footprint ~370 KiB, everything VMEM-resident.
    )(x_in, w1, w2, w3)

    return out_pad[:, :OUT_DIM]


# ----------------------------- reference (pure JAX, f32) ---------------------
def ref_forward(x_emb, x_cont, wq, wk, wv, w_enc, b_enc, w_dec, b_dec):
    q = jnp.einsum('bce,ef->bcf', x_emb, wq)
    k = jnp.einsum('bce,ef->bcf', x_emb, wk)
    v = jnp.einsum('bce,ef->bcf', x_emb, wv)
    s = jnp.einsum('bcf,bdf->bcd', q, k) / math.sqrt(EMB_DIM)
    p = jax.nn.softmax(s, axis=-1)
    attn = jnp.einsum('bcd,bdf->bcf', p, v)
    xin = jnp.concatenate([attn.reshape(x_emb.shape[0], FLAT), x_cont], axis=1)
    h = jnp.maximum(xin @ w_enc + b_enc[0], 0.0)
    return h @ w_dec + b_dec[0]


# ----------------------------- main ------------------------------------------
if __name__ == "__main__":
    key = jax.random.PRNGKey(0)
    keys = jax.random.split(key, 16)

    # --- deterministic "module parameters" ---
    emb_tables = [
        jax.random.normal(keys[i], (CARDINALITIES[i], EMB_FREE), jnp.float32) * 0.1
        for i in range(N_CAT)
    ]
    shared_embedding = jax.random.uniform(
        keys[4], (N_CAT, EMB_SHRD), jnp.float32, minval=-1.0, maxval=1.0)
    wq = jax.random.normal(keys[5], (EMB_DIM, EMB_DIM), jnp.float32) * 0.1
    wk = jax.random.normal(keys[6], (EMB_DIM, EMB_DIM), jnp.float32) * 0.1
    wv = jax.random.normal(keys[7], (EMB_DIM, EMB_DIM), jnp.float32) * 0.1
    # encoder: Linear(OUT_DIM -> HIDDEN) + ReLU ; decoder: Linear(HIDDEN -> OUT_DIM)
    w_enc = jax.random.normal(keys[8], (OUT_DIM, HIDDEN), jnp.float32) * 0.05
    b_enc = jax.random.normal(keys[9], (1, HIDDEN), jnp.float32) * 0.01
    w_dec = jax.random.normal(keys[10], (HIDDEN, OUT_DIM), jnp.float32) * 0.05
    b_dec = jax.random.normal(keys[11], (1, OUT_DIM), jnp.float32) * 0.01

    # Pack once at init time (not in the per-call path).
    w1, w2, w3 = jax.block_until_ready(
        pack_params(wq, wk, wv, w_enc, b_enc, w_dec, b_dec))

    # --- deterministic inputs ---
    x_cat = jnp.stack(
        [jax.random.randint(jax.random.fold_in(keys[12], i), (B,), 0,
                            CARDINALITIES[i])
         for i in range(N_CAT)], axis=1)                          # (B, N_CAT) int32
    x_cont = jax.random.normal(keys[13], (B, N_CONT), jnp.float32)

    out = attention_ae_forward(x_cat, x_cont, emb_tables, shared_embedding,
                               w1, w2, w3)
    out = jax.block_until_ready(out)

    # Reference path (f32, un-packed params).
    per_feat = [emb_tables[i][x_cat[:, i]] for i in range(N_CAT)]
    x_emb = jnp.concatenate(
        [jnp.stack(per_feat, axis=1),
         jnp.broadcast_to(shared_embedding[None], (B, N_CAT, EMB_SHRD))], axis=2)
    ref = ref_forward(x_emb, x_cont, wq, wk, wv, w_enc, b_enc, w_dec, b_dec)

    np.testing.assert_allclose(np.asarray(out), np.asarray(ref),
                               rtol=1e-2, atol=1e-2)
    print("KERNEL_OK")
</pallas_src>

<mosaic_0001>
module attributes {stable_mosaic.version = 11 : i64} {
  func.func @attention_ae_kernel(%arg0: memref<16x256xbf16, #tpu.memory_space<vmem>>, %arg1: memref<256x512xbf16, #tpu.memory_space<vmem>>, %arg2: memref<128x128xbf16, #tpu.memory_space<vmem>>, %arg3: memref<128x256xbf16, #tpu.memory_space<vmem>>, %arg4: memref<16x256xf32, #tpu.memory_space<vmem>>) attributes {dimension_semantics = [], scalar_prefetch = 0 : i64, scratch_operands = 0 : i64, tpu.core_type = #tpu.core_type<tc>} {
    %c0 = arith.constant 0 : index
    %c0_0 = arith.constant 0 : index
    %0 = vector.load %arg0[%c0, %c0_0] : memref<16x256xbf16, #tpu.memory_space<vmem>>, vector<16x256xbf16>
    %c0_1 = arith.constant 0 : index
    %c0_2 = arith.constant 0 : index
    %1 = vector.load %arg1[%c0_1, %c0_2] : memref<256x512xbf16, #tpu.memory_space<vmem>>, vector<256x512xbf16>
    %cst = arith.constant dense<0.000000e+00> : vector<16x512xf32>
    %2 = tpu.matmul %0, %1, %cst {dimension_numbers = #tpu.dot_dimension_numbers<[1], [0], [0], [1], [0, 0, 1, 1], [], []>} : vector<16x256xbf16>, vector<256x512xbf16>, vector<16x512xf32> -> vector<16x512xf32>
    %3 = vector.extract_strided_slice %2 {offsets = [0, 0], sizes = [16, 128], strides = [1, 1]} : vector<16x512xf32> to vector<16x128xf32>
    %4 = vector.extract_strided_slice %2 {offsets = [0, 128], sizes = [16, 128], strides = [1, 1]} : vector<16x512xf32> to vector<16x128xf32>
    %5 = vector.extract_strided_slice %2 {offsets = [0, 256], sizes = [16, 128], strides = [1, 1]} : vector<16x512xf32> to vector<16x128xf32>
    %6 = vector.extract_strided_slice %2 {offsets = [0, 384], sizes = [16, 128], strides = [1, 1]} : vector<16x512xf32> to vector<16x128xf32>
    %7 = vector.extract_strided_slice %3 {offsets = [0, 0], sizes = [16, 32], strides = [1, 1]} : vector<16x128xf32> to vector<16x32xf32>
    %8 = vector.extract_strided_slice %3 {offsets = [0, 32], sizes = [16, 32], strides = [1, 1]} : vector<16x128xf32> to vector<16x32xf32>
    %9 = vector.extract_strided_slice %3 {offsets = [0, 64], sizes = [16, 32], strides = [1, 1]} : vector<16x128xf32> to vector<16x32xf32>
    %10 = vector.extract_strided_slice %3 {offsets = [0, 96], sizes = [16, 32], strides = [1, 1]} : vector<16x128xf32> to vector<16x32xf32>
    %11 = vector.extract_strided_slice %4 {offsets = [0, 0], sizes = [16, 32], strides = [1, 1]} : vector<16x128xf32> to vector<16x32xf32>
    %12 = vector.extract_strided_slice %4 {offsets = [0, 32], sizes = [16, 32], strides = [1, 1]} : vector<16x128xf32> to vector<16x32xf32>
    %13 = vector.extract_strided_slice %4 {offsets = [0, 64], sizes = [16, 32], strides = [1, 1]} : vector<16x128xf32> to vector<16x32xf32>
    %14 = vector.extract_strided_slice %4 {offsets = [0, 96], sizes = [16, 32], strides = [1, 1]} : vector<16x128xf32> to vector<16x32xf32>
    %15 = vector.extract_strided_slice %5 {offsets = [0, 0], sizes = [16, 32], strides = [1, 1]} : vector<16x128xf32> to vector<16x32xf32>
    %16 = vector.extract_strided_slice %5 {offsets = [0, 32], sizes = [16, 32], strides = [1, 1]} : vector<16x128xf32> to vector<16x32xf32>
    %17 = vector.extract_strided_slice %5 {offsets = [0, 64], sizes = [16, 32], strides = [1, 1]} : vector<16x128xf32> to vector<16x32xf32>
    %18 = vector.extract_strided_slice %5 {offsets = [0, 96], sizes = [16, 32], strides = [1, 1]} : vector<16x128xf32> to vector<16x32xf32>
    %19 = arith.mulf %7, %11 : vector<16x32xf32>
    %cst_3 = arith.constant dense<0.000000e+00> : vector<16xf32>
    %20 = vector.multi_reduction <add>, %19, %cst_3 [1] : vector<16x32xf32> to vector<16xf32>
    %21 = vector.shape_cast %20 : vector<16xf32> to vector<16x1xf32>
    %22 = arith.mulf %7, %12 : vector<16x32xf32>
    %cst_4 = arith.constant dense<0.000000e+00> : vector<16xf32>
    %23 = vector.multi_reduction <add>, %22, %cst_4 [1] : vector<16x32xf32> to vector<16xf32>
    %24 = vector.shape_cast %23 : vector<16xf32> to vector<16x1xf32>
    %25 = arith.mulf %7, %13 : vector<16x32xf32>
    %cst_5 = arith.constant dense<0.000000e+00> : vector<16xf32>
    %26 = vector.multi_reduction <add>, %25, %cst_5 [1] : vector<16x32xf32> to vector<16xf32>
    %27 = vector.shape_cast %26 : vector<16xf32> to vector<16x1xf32>
    %28 = arith.mulf %7, %14 : vector<16x32xf32>
    %cst_6 = arith.constant dense<0.000000e+00> : vector<16xf32>
    %29 = vector.multi_reduction <add>, %28, %cst_6 [1] : vector<16x32xf32> to vector<16xf32>
    %30 = vector.shape_cast %29 : vector<16xf32> to vector<16x1xf32>
    %31 = arith.maximumf %21, %24 : vector<16x1xf32>
    %32 = arith.maximumf %31, %27 : vector<16x1xf32>
    %33 = arith.maximumf %32, %30 : vector<16x1xf32>
    %34 = arith.subf %21, %33 : vector<16x1xf32>
    %35 = math.exp %34 : vector<16x1xf32>
    %36 = arith.subf %24, %33 : vector<16x1xf32>
    %37 = math.exp %36 : vector<16x1xf32>
    %38 = arith.subf %27, %33 : vector<16x1xf32>
    %39 = math.exp %38 : vector<16x1xf32>
    %40 = arith.subf %30, %33 : vector<16x1xf32>
    %41 = math.exp %40 : vector<16x1xf32>
    %42 = arith.addf %35, %37 : vector<16x1xf32>
    %43 = arith.addf %42, %39 : vector<16x1xf32>
    %44 = arith.addf %43, %41 : vector<16x1xf32>
    %45 = tpu.reciprocal %44 {approx = true} : vector<16x1xf32> -> vector<16x1xf32>
    %46 = arith.mulf %35, %45 : vector<16x1xf32>
    %47 = vector.broadcast %46 : vector<16x1xf32> to vector<16x32xf32>
    %48 = arith.mulf %47, %15 : vector<16x32xf32>
    %49 = arith.mulf %37, %45 : vector<16x1xf32>
    %50 = vector.broadcast %49 : vector<16x1xf32> to vector<16x32xf32>
    %51 = arith.mulf %50, %16 : vector<16x32xf32>
    %52 = arith.addf %48, %51 : vector<16x32xf32>
    %53 = arith.mulf %39, %45 : vector<16x1xf32>
    %54 = vector.broadcast %53 : vector<16x1xf32> to vector<16x32xf32>
    %55 = arith.mulf %54, %17 : vector<16x32xf32>
    %56 = arith.addf %52, %55 : vector<16x32xf32>
    %57 = arith.mulf %41, %45 : vector<16x1xf32>
    %58 = vector.broadcast %57 : vector<16x1xf32> to vector<16x32xf32>
    %59 = arith.mulf %58, %18 : vector<16x32xf32>
    %60 = arith.addf %56, %59 : vector<16x32xf32>
    %61 = arith.mulf %8, %11 : vector<16x32xf32>
    %cst_7 = arith.constant dense<0.000000e+00> : vector<16xf32>
    %62 = vector.multi_reduction <add>, %61, %cst_7 [1] : vector<16x32xf32> to vector<16xf32>
    %63 = vector.shape_cast %62 : vector<16xf32> to vector<16x1xf32>
    %64 = arith.mulf %8, %12 : vector<16x32xf32>
    %cst_8 = arith.constant dense<0.000000e+00> : vector<16xf32>
    %65 = vector.multi_reduction <add>, %64, %cst_8 [1] : vector<16x32xf32> to vector<16xf32>
    %66 = vector.shape_cast %65 : vector<16xf32> to vector<16x1xf32>
    %67 = arith.mulf %8, %13 : vector<16x32xf32>
    %cst_9 = arith.constant dense<0.000000e+00> : vector<16xf32>
    %68 = vector.multi_reduction <add>, %67, %cst_9 [1] : vector<16x32xf32> to vector<16xf32>
    %69 = vector.shape_cast %68 : vector<16xf32> to vector<16x1xf32>
    %70 = arith.mulf %8, %14 : vector<16x32xf32>
    %cst_10 = arith.constant dense<0.000000e+00> : vector<16xf32>
    %71 = vector.multi_reduction <add>, %70, %cst_10 [1] : vector<16x32xf32> to vector<16xf32>
    %72 = vector.shape_cast %71 : vector<16xf32> to vector<16x1xf32>
    %73 = arith.maximumf %63, %66 : vector<16x1xf32>
    %74 = arith.maximumf %73, %69 : vector<16x1xf32>
    %75 = arith.maximumf %74, %72 : vector<16x1xf32>
    %76 = arith.subf %63, %75 : vector<16x1xf32>
    %77 = math.exp %76 : vector<16x1xf32>
    %78 = arith.subf %66, %75 : vector<16x1xf32>
    %79 = math.exp %78 : vector<16x1xf32>
    %80 = arith.subf %69, %75 : vector<16x1xf32>
    %81 = math.exp %80 : vector<16x1xf32>
    %82 = arith.subf %72, %75 : vector<16x1xf32>
    %83 = math.exp %82 : vector<16x1xf32>
    %84 = arith.addf %77, %79 : vector<16x1xf32>
    %85 = arith.addf %84, %81 : vector<16x1xf32>
    %86 = arith.addf %85, %83 : vector<16x1xf32>
    %87 = tpu.reciprocal %86 {approx = true} : vector<16x1xf32> -> vector<16x1xf32>
    %88 = arith.mulf %77, %87 : vector<16x1xf32>
    %89 = vector.broadcast %88 : vector<16x1xf32> to vector<16x32xf32>
    %90 = arith.mulf %89, %15 : vector<16x32xf32>
    %91 = arith.mulf %79, %87 : vector<16x1xf32>
    %92 = vector.broadcast %91 : vector<16x1xf32> to vector<16x32xf32>
    %93 = arith.mulf %92, %16 : vector<16x32xf32>
    %94 = arith.addf %90, %93 : vector<16x32xf32>
    %95 = arith.mulf %81, %87 : vector<16x1xf32>
    %96 = vector.broadcast %95 : vector<16x1xf32> to vector<16x32xf32>
    %97 = arith.mulf %96, %17 : vector<16x32xf32>
    %98 = arith.addf %94, %97 : vector<16x32xf32>
    %99 = arith.mulf %83, %87 : vector<16x1xf32>
    %100 = vector.broadcast %99 : vector<16x1xf32> to vector<16x32xf32>
    %101 = arith.mulf %100, %18 : vector<16x32xf32>
    %102 = arith.addf %98, %101 : vector<16x32xf32>
    %103 = arith.mulf %9, %11 : vector<16x32xf32>
    %cst_11 = arith.constant dense<0.000000e+00> : vector<16xf32>
    %104 = vector.multi_reduction <add>, %103, %cst_11 [1] : vector<16x32xf32> to vector<16xf32>
    %105 = vector.shape_cast %104 : vector<16xf32> to vector<16x1xf32>
    %106 = arith.mulf %9, %12 : vector<16x32xf32>
    %cst_12 = arith.constant dense<0.000000e+00> : vector<16xf32>
    %107 = vector.multi_reduction <add>, %106, %cst_12 [1] : vector<16x32xf32> to vector<16xf32>
    %108 = vector.shape_cast %107 : vector<16xf32> to vector<16x1xf32>
    %109 = arith.mulf %9, %13 : vector<16x32xf32>
    %cst_13 = arith.constant dense<0.000000e+00> : vector<16xf32>
    %110 = vector.multi_reduction <add>, %109, %cst_13 [1] : vector<16x32xf32> to vector<16xf32>
    %111 = vector.shape_cast %110 : vector<16xf32> to vector<16x1xf32>
    %112 = arith.mulf %9, %14 : vector<16x32xf32>
    %cst_14 = arith.constant dense<0.000000e+00> : vector<16xf32>
    %113 = vector.multi_reduction <add>, %112, %cst_14 [1] : vector<16x32xf32> to vector<16xf32>
    %114 = vector.shape_cast %113 : vector<16xf32> to vector<16x1xf32>
    %115 = arith.maximumf %105, %108 : vector<16x1xf32>
    %116 = arith.maximumf %115, %111 : vector<16x1xf32>
    %117 = arith.maximumf %116, %114 : vector<16x1xf32>
    %118 = arith.subf %105, %117 : vector<16x1xf32>
    %119 = math.exp %118 : vector<16x1xf32>
    %120 = arith.subf %108, %117 : vector<16x1xf32>
    %121 = math.exp %120 : vector<16x1xf32>
    %122 = arith.subf %111, %117 : vector<16x1xf32>
    %123 = math.exp %122 : vector<16x1xf32>
    %124 = arith.subf %114, %117 : vector<16x1xf32>
    %125 = math.exp %124 : vector<16x1xf32>
    %126 = arith.addf %119, %121 : vector<16x1xf32>
    %127 = arith.addf %126, %123 : vector<16x1xf32>
    %128 = arith.addf %127, %125 : vector<16x1xf32>
    %129 = tpu.reciprocal %128 {approx = true} : vector<16x1xf32> -> vector<16x1xf32>
    %130 = arith.mulf %119, %129 : vector<16x1xf32>
    %131 = vector.broadcast %130 : vector<16x1xf32> to vector<16x32xf32>
    %132 = arith.mulf %131, %15 : vector<16x32xf32>
    %133 = arith.mulf %121, %129 : vector<16x1xf32>
    %134 = vector.broadcast %133 : vector<16x1xf32> to vector<16x32xf32>
    %135 = arith.mulf %134, %16 : vector<16x32xf32>
    %136 = arith.addf %132, %135 : vector<16x32xf32>
    %137 = arith.mulf %123, %129 : vector<16x1xf32>
    %138 = vector.broadcast %137 : vector<16x1xf32> to vector<16x32xf32>
    %139 = arith.mulf %138, %17 : vector<16x32xf32>
    %140 = arith.addf %136, %139 : vector<16x32xf32>
    %141 = arith.mulf %125, %129 : vector<16x1xf32>
    %142 = vector.broadcast %141 : vector<16x1xf32> to vector<16x32xf32>
    %143 = arith.mulf %142, %18 : vector<16x32xf32>
    %144 = arith.addf %140, %143 : vector<16x32xf32>
    %145 = arith.mulf %10, %11 : vector<16x32xf32>
    %cst_15 = arith.constant dense<0.000000e+00> : vector<16xf32>
    %146 = vector.multi_reduction <add>, %145, %cst_15 [1] : vector<16x32xf32> to vector<16xf32>
    %147 = vector.shape_cast %146 : vector<16xf32> to vector<16x1xf32>
    %148 = arith.mulf %10, %12 : vector<16x32xf32>
    %cst_16 = arith.constant dense<0.000000e+00> : vector<16xf32>
    %149 = vector.multi_reduction <add>, %148, %cst_16 [1] : vector<16x32xf32> to vector<16xf32>
    %150 = vector.shape_cast %149 : vector<16xf32> to vector<16x1xf32>
    %151 = arith.mulf %10, %13 : vector<16x32xf32>
    %cst_17 = arith.constant dense<0.000000e+00> : vector<16xf32>
    %152 = vector.multi_reduction <add>, %151, %cst_17 [1] : vector<16x32xf32> to vector<16xf32>
    %153 = vector.shape_cast %152 : vector<16xf32> to vector<16x1xf32>
    %154 = arith.mulf %10, %14 : vector<16x32xf32>
    %cst_18 = arith.constant dense<0.000000e+00> : vector<16xf32>
    %155 = vector.multi_reduction <add>, %154, %cst_18 [1] : vector<16x32xf32> to vector<16xf32>
    %156 = vector.shape_cast %155 : vector<16xf32> to vector<16x1xf32>
    %157 = arith.maximumf %147, %150 : vector<16x1xf32>
    %158 = arith.maximumf %157, %153 : vector<16x1xf32>
    %159 = arith.maximumf %158, %156 : vector<16x1xf32>
    %160 = arith.subf %147, %159 : vector<16x1xf32>
    %161 = math.exp %160 : vector<16x1xf32>
    %162 = arith.subf %150, %159 : vector<16x1xf32>
    %163 = math.exp %162 : vector<16x1xf32>
    %164 = arith.subf %153, %159 : vector<16x1xf32>
    %165 = math.exp %164 : vector<16x1xf32>
    %166 = arith.subf %156, %159 : vector<16x1xf32>
    %167 = math.exp %166 : vector<16x1xf32>
    %168 = arith.addf %161, %163 : vector<16x1xf32>
    %169 = arith.addf %168, %165 : vector<16x1xf32>
    %170 = arith.addf %169, %167 : vector<16x1xf32>
    %171 = tpu.reciprocal %170 {approx = true} : vector<16x1xf32> -> vector<16x1xf32>
    %172 = arith.mulf %161, %171 : vector<16x1xf32>
    %173 = vector.broadcast %172 : vector<16x1xf32> to vector<16x32xf32>
    %174 = arith.mulf %173, %15 : vector<16x32xf32>
    %175 = arith.mulf %163, %171 : vector<16x1xf32>
    %176 = vector.broadcast %175 : vector<16x1xf32> to vector<16x32xf32>
    %177 = arith.mulf %176, %16 : vector<16x32xf32>
    %178 = arith.addf %174, %177 : vector<16x32xf32>
    %179 = arith.mulf %165, %171 : vector<16x1xf32>
    %180 = vector.broadcast %179 : vector<16x1xf32> to vector<16x32xf32>
    %181 = arith.mulf %180, %17 : vector<16x32xf32>
    %182 = arith.addf %178, %181 : vector<16x32xf32>
    %183 = arith.mulf %167, %171 : vector<16x1xf32>
    %184 = vector.broadcast %183 : vector<16x1xf32> to vector<16x32xf32>
    %185 = arith.mulf %184, %18 : vector<16x32xf32>
    %186 = arith.addf %182, %185 : vector<16x32xf32>
    %187 = tpu.concatenate %60, %102, %144, %186 in 1 : vector<16x32xf32>, vector<16x32xf32>, vector<16x32xf32>, vector<16x32xf32> -> vector<16x128xf32>
    %188 = arith.truncf %187 : vector<16x128xf32> to vector<16x128xbf16>
    %c0_19 = arith.constant 0 : index
    %c0_20 = arith.constant 0 : index
    %189 = vector.load %arg2[%c0_19, %c0_20] : memref<128x128xbf16, #tpu.memory_space<vmem>>, vector<128x128xbf16>
    %cst_21 = arith.constant dense<0.000000e+00> : vector<16x128xf32>
    %190 = tpu.matmul %188, %189, %cst_21 {dimension_numbers = #tpu.dot_dimension_numbers<[1], [0], [0], [1], [0, 0, 1, 1], [], []>} : vector<16x128xbf16>, vector<128x128xbf16>, vector<16x128xf32> -> vector<16x128xf32>
    %191 = arith.addf %190, %6 : vector<16x128xf32>
    %cst_22 = arith.constant 0.000000e+00 : f32
    %192 = vector.broadcast %cst_22 : f32 to vector<16x128xf32>
    %193 = arith.maximumf %191, %192 : vector<16x128xf32>
    %194 = arith.truncf %193 : vector<16x128xf32> to vector<16x128xbf16>
    %c0_23 = arith.constant 0 : index
    %c0_24 = arith.constant 0 : index
    %195 = vector.load %arg3[%c0_23, %c0_24] : memref<128x256xbf16, #tpu.memory_space<vmem>>, vector<128x256xbf16>
    %cst_25 = arith.constant dense<0.000000e+00> : vector<16x256xf32>
    %196 = tpu.matmul %194, %195, %cst_25 {dimension_numbers = #tpu.dot_dimension_numbers<[1], [0], [0], [1], [0, 0, 1, 1], [], []>} : vector<16x128xbf16>, vector<128x256xbf16>, vector<16x256xf32> -> vector<16x256xf32>
    %c0_26 = arith.constant 0 : index
    %c0_27 = arith.constant 0 : index
    %197 = vector.load %arg4[%c0_26, %c0_27] : memref<16x256xf32, #tpu.memory_space<vmem>>, vector<16x256xf32>
    tpu.vector_store %arg4[%c0_26, %c0_27], %196 {strides = array<i32>} : memref<16x256xf32, #tpu.memory_space<vmem>>, vector<16x256xf32>,
    return
  }
}

</mosaic_0001>

<llo_original>
// kernel: attention_ae_forward.1
$region0: #{attention_ae_forward.1}
  #allocation0 [shape = 'u32[]', space=smem, size = 0x4, offset = 0x4, fixed_abs, tag = 'smem constant byte address 0x4 - core index']
  #allocation1 [shape = 'u32[144,128]{1,0:T(1,128)}', space=vmem, size = 0x12000, scoped, tag = 'internal scratch']
  %s0 = inlined_call_operand.vmem [shape: bf16[16,256], index: 0, kind: input, shape index: {}]
  %s1 = inlined_call_operand.vmem [shape: bf16[256,512], index: 1, kind: input, shape index: {}]
  %s2 = inlined_call_operand.vmem [shape: bf16[128,128], index: 2, kind: input, shape index: {}]
  %s3 = inlined_call_operand.vmem [shape: bf16[128,256], index: 3, kind: input, shape index: {}]
  %s4 = inlined_call_operand.hbm [shape: f32[16,256], index: 4, kind: output, shape index: {}]
  %s5 = sld [smem:[#allocation0]]
  $region26: #{attention_ae_forward.1} parent=0
    _
  %s7 = ssub.s32 1, %s5
  %s8 = scalar_select 0, %s7, %s5
  $region1: #{attention_ae_forward.1} parent=0
    #allocation2 [shape = 'u8[16384]{0}', space=vmem, size = 0x4000, scoped, tag = 'output window, operand 0, single buffered']
    #allocation3 [shape = 's32[1]{0}', space=sflag, size = 0x4, scoped, tag = 'scoped memory for attention_ae_forward.1']
    %9 = vsyncpa [#allocation3], 0
    // Predicated region
    $region2: #{attention_ae_forward.1} parent=1 // pred_check
      _
    $region3: #{attention_ae_forward.1} parent=1 // pred_check_branch
      %11 = sbr.rel (0) target = $region5
    $region4: #{attention_ae_forward.1} parent=1 // pred_region
      _
    $region5: #{attention_ae_forward.1} parent=1 // pred_fallthru
      _
    // Predicated region
    $region6: #{attention_ae_forward.1} parent=1 // pred_check
      _
    $region7: #{attention_ae_forward.1} parent=1 // pred_check_branch
      %13 = sbr.rel (0) target = $region9
    $region8: #{attention_ae_forward.1} parent=1 // pred_region
      _
    $region9: #{attention_ae_forward.1} parent=1 // pred_fallthru
      _
    // Predicated region
    $region10: #{attention_ae_forward.1} parent=1 // pred_check
      _
    $region11: #{attention_ae_forward.1} parent=1 // pred_check_branch
      %15 = sbr.rel (0) target = $region13
    $region12: #{attention_ae_forward.1} parent=1 // pred_region
      _
    $region13: #{attention_ae_forward.1} parent=1 // pred_fallthru
      _
    // Predicated region
    $region14: #{attention_ae_forward.1} parent=1 // pred_check
      _
    $region15: #{attention_ae_forward.1} parent=1 // pred_check_branch
      %17 = sbr.rel (0) target = $region17
    $region16: #{attention_ae_forward.1} parent=1 // pred_region
      _
    $region17: #{attention_ae_forward.1} parent=1 // pred_fallthru
      _
    %v19 = vld [vmem:[%s0] sm:$0xff]
    %v20 = vld [vmem:[%s0 + $0x8] sm:$0xff]
    %v21 = vld [vmem:[%s1] sm:$0xff]
    %v22 = vld [vmem:[%s1 + $0x8] sm:$0xff]
    %v23 = vld [vmem:[%s1 + $0x10] sm:$0xff]
    %v24 = vld [vmem:[%s1 + $0x18] sm:$0xff]
    %v25 = vld [vmem:[%s1 + $0x20] sm:$0xff]
    %v26 = vld [vmem:[%s1 + $0x28] sm:$0xff]
    %v27 = vld [vmem:[%s1 + $0x30] sm:$0xff]
    %v28 = vld [vmem:[%s1 + $0x38] sm:$0xff]
    %v29 = vld [vmem:[%s1 + $0x40] sm:$0xff]
    %v30 = vld [vmem:[%s1 + $0x48] sm:$0xff]
    %v31 = vld [vmem:[%s1 + $0x50] sm:$0xff]
    %v32 = vld [vmem:[%s1 + $0x58] sm:$0xff]
    %v33 = vld [vmem:[%s1 + $0x60] sm:$0xff]
    %v34 = vld [vmem:[%s1 + $0x68] sm:$0xff]
    %v35 = vld [vmem:[%s1 + $0x70] sm:$0xff]
    %v36 = vld [vmem:[%s1 + $0x78] sm:$0xff]
    %v37 = vld [vmem:[%s1 + $0x80] sm:$0xff]
    %v38 = vld [vmem:[%s1 + $0x88] sm:$0xff]
    %v39 = vld [vmem:[%s1 + $0x90] sm:$0xff]
    %v40 = vld [vmem:[%s1 + $0x98] sm:$0xff]
    %v41 = vld [vmem:[%s1 + $0xa0] sm:$0xff]
    %v42 = vld [vmem:[%s1 + $0xa8] sm:$0xff]
    %v43 = vld [vmem:[%s1 + $0xb0] sm:$0xff]
    %v44 = vld [vmem:[%s1 + $0xb8] sm:$0xff]
    %v45 = vld [vmem:[%s1 + $0xc0] sm:$0xff]
    %v46 = vld [vmem:[%s1 + $0xc8] sm:$0xff]
    %v47 = vld [vmem:[%s1 + $0xd0] sm:$0xff]
    %v48 = vld [vmem:[%s1 + $0xd8] sm:$0xff]
    %v49 = vld [vmem:[%s1 + $0xe0] sm:$0xff]
    %v50 = vld [vmem:[%s1 + $0xe8] sm:$0xff]
    %v51 = vld [vmem:[%s1 + $0xf0] sm:$0xff]
    %v52 = vld [vmem:[%s1 + $0xf8] sm:$0xff]
    %v53 = vld [vmem:[%s1 + $0x100] sm:$0xff]
    %v54 = vld [vmem:[%s1 + $0x108] sm:$0xff]
    %v55 = vld [vmem:[%s1 + $0x110] sm:$0xff]
    %v56 = vld [vmem:[%s1 + $0x118] sm:$0xff]
    %v57 = vld [vmem:[%s1 + $0x120] sm:$0xff]
    %v58 = vld [vmem:[%s1 + $0x128] sm:$0xff]
    %v59 = vld [vmem:[%s1 + $0x130] sm:$0xff]
    %v60 = vld [vmem:[%s1 + $0x138] sm:$0xff]
    %v61 = vld [vmem:[%s1 + $0x140] sm:$0xff]
    %v62 = vld [vmem:[%s1 + $0x148] sm:$0xff]
    %v63 = vld [vmem:[%s1 + $0x150] sm:$0xff]
    %v64 = vld [vmem:[%s1 + $0x158] sm:$0xff]
    %v65 = vld [vmem:[%s1 + $0x160] sm:$0xff]
    %v66 = vld [vmem:[%s1 + $0x168] sm:$0xff]
    %v67 = vld [vmem:[%s1 + $0x170] sm:$0xff]
    %v68 = vld [vmem:[%s1 + $0x178] sm:$0xff]
    %v69 = vld [vmem:[%s1 + $0x180] sm:$0xff]
    %v70 = vld [vmem:[%s1 + $0x188] sm:$0xff]
    %v71 = vld [vmem:[%s1 + $0x190] sm:$0xff]
    %v72 = vld [vmem:[%s1 + $0x198] sm:$0xff]
    %v73 = vld [vmem:[%s1 + $0x1a0] sm:$0xff]
    %v74 = vld [vmem:[%s1 + $0x1a8] sm:$0xff]
    %v75 = vld [vmem:[%s1 + $0x1b0] sm:$0xff]
    %v76 = vld [vmem:[%s1 + $0x1b8] sm:$0xff]
    %v77 = vld [vmem:[%s1 + $0x1c0] sm:$0xff]
    %v78 = vld [vmem:[%s1 + $0x1c8] sm:$0xff]
    %v79 = vld [vmem:[%s1 + $0x1d0] sm:$0xff]
    %v80 = vld [vmem:[%s1 + $0x1d8] sm:$0xff]
    %v81 = vld [vmem:[%s1 + $0x1e0] sm:$0xff]
    %v82 = vld [vmem:[%s1 + $0x1e8] sm:$0xff]
    %v83 = vld [vmem:[%s1 + $0x1f0] sm:$0xff]
    %v84 = vld [vmem:[%s1 + $0x1f8] sm:$0xff]
    %v87 = vunpack.c.l.b16 %v19
    %v88 = vunpack.c.h.b16 %v19
    %v89 = vunpack.c.l.b16 %v20
    %v90 = vunpack.c.h.b16 %v20
    %v91 = vpack.c.b16 %v89, %v87
    %v92 = vpack.c.b16 %v90, %v88
    %v159 = vunpack.c.l.b16 %v21
    %v160 = vunpack.c.h.b16 %v21
    %v161 = vunpack.c.l.b16 %v22
    %v162 = vunpack.c.h.b16 %v22
    %v163 = vunpack.c.l.b16 %v23
    %v164 = vunpack.c.h.b16 %v23
    %v165 = vunpack.c.l.b16 %v24
    %v166 = vunpack.c.h.b16 %v24
    %v167 = vunpack.c.l.b16 %v25
    %v168 = vunpack.c.h.b16 %v25
    %v169 = vunpack.c.l.b16 %v26
    %v170 = vunpack.c.h.b16 %v26
    %v171 = vunpack.c.l.b16 %v27
    %v172 = vunpack.c.h.b16 %v27
    %v173 = vunpack.c.l.b16 %v28
    %v174 = vunpack.c.h.b16 %v28
    %v175 = vunpack.c.l.b16 %v29
    %v176 = vunpack.c.h.b16 %v29
    %v177 = vunpack.c.l.b16 %v30
    %v178 = vunpack.c.h.b16 %v30
    %v179 = vunpack.c.l.b16 %v31
    %v180 = vunpack.c.h.b16 %v31
    %v181 = vunpack.c.l.b16 %v32
    %v182 = vunpack.c.h.b16 %v32
    %v183 = vunpack.c.l.b16 %v33
    %v184 = vunpack.c.h.b16 %v33
    %v185 = vunpack.c.l.b16 %v34
    %v186 = vunpack.c.h.b16 %v34
    %v187 = vunpack.c.l.b16 %v35
    %v188 = vunpack.c.h.b16 %v35
    %v189 = vunpack.c.l.b16 %v36
    %v190 = vunpack.c.h.b16 %v36
    %v191 = vunpack.c.l.b16 %v37
    %v192 = vunpack.c.h.b16 %v37
    %v193 = vunpack.c.l.b16 %v38
    %v194 = vunpack.c.h.b16 %v38
    %v195 = vunpack.c.l.b16 %v39
    %v196 = vunpack.c.h.b16 %v39
    %v197 = vunpack.c.l.b16 %v40
    %v198 = vunpack.c.h.b16 %v40
    %v199 = vunpack.c.l.b16 %v41
    %v200 = vunpack.c.h.b16 %v41
    %v201 = vunpack.c.l.b16 %v42
    %v202 = vunpack.c.h.b16 %v42
    %v203 = vunpack.c.l.b16 %v43
    %v204 = vunpack.c.h.b16 %v43
    %v205 = vunpack.c.l.b16 %v44
    %v206 = vunpack.c.h.b16 %v44
    %v207 = vunpack.c.l.b16 %v45
    %v208 = vunpack.c.h.b16 %v45
    %v209 = vunpack.c.l.b16 %v46
    %v210 = vunpack.c.h.b16 %v46
    %v211 = vunpack.c.l.b16 %v47
    %v212 = vunpack.c.h.b16 %v47
    %v213 = vunpack.c.l.b16 %v48
    %v214 = vunpack.c.h.b16 %v48
    %v215 = vunpack.c.l.b16 %v49
    %v216 = vunpack.c.h.b16 %v49
    %v217 = vunpack.c.l.b16 %v50
    %v218 = vunpack.c.h.b16 %v50
    %v219 = vunpack.c.l.b16 %v51
    %v220 = vunpack.c.h.b16 %v51
    %v221 = vunpack.c.l.b16 %v52
    %v222 = vunpack.c.h.b16 %v52
    %v223 = vunpack.c.l.b16 %v53
    %v224 = vunpack.c.h.b16 %v53
    %v225 = vunpack.c.l.b16 %v54
    %v226 = vunpack.c.h.b16 %v54
    %v227 = vunpack.c.l.b16 %v55
    %v228 = vunpack.c.h.b16 %v55
    %v229 = vunpack.c.l.b16 %v56
    %v230 = vunpack.c.h.b16 %v56
    %v231 = vunpack.c.l.b16 %v57
    %v232 = vunpack.c.h.b16 %v57
    %v233 = vunpack.c.l.b16 %v58
    %v234 = vunpack.c.h.b16 %v58
    %v235 = vunpack.c.l.b16 %v59
    %v236 = vunpack.c.h.b16 %v59
    %v237 = vunpack.c.l.b16 %v60
    %v238 = vunpack.c.h.b16 %v60
    %v239 = vunpack.c.l.b16 %v61
    %v240 = vunpack.c.h.b16 %v61
    %v241 = vunpack.c.l.b16 %v62
    %v242 = vunpack.c.h.b16 %v62
    %v243 = vunpack.c.l.b16 %v63
    %v244 = vunpack.c.h.b16 %v63
    %v245 = vunpack.c.l.b16 %v64
    %v246 = vunpack.c.h.b16 %v64
    %v247 = vunpack.c.l.b16 %v65
    %v248 = vunpack.c.h.b16 %v65
    %v249 = vunpack.c.l.b16 %v66
    %v250 = vunpack.c.h.b16 %v66
    %v251 = vunpack.c.l.b16 %v67
    %v252 = vunpack.c.h.b16 %v67
    %v253 = vunpack.c.l.b16 %v68
    %v254 = vunpack.c.h.b16 %v68
    %v255 = vunpack.c.l.b16 %v69
    %v256 = vunpack.c.h.b16 %v69
    %v257 = vunpack.c.l.b16 %v70
    %v258 = vunpack.c.h.b16 %v70
    %v259 = vunpack.c.l.b16 %v71
    %v260 = vunpack.c.h.b16 %v71
    %v261 = vunpack.c.l.b16 %v72
    %v262 = vunpack.c.h.b16 %v72
    %v263 = vunpack.c.l.b16 %v73
    %v264 = vunpack.c.h.b16 %v73
    %v265 = vunpack.c.l.b16 %v74
    %v266 = vunpack.c.h.b16 %v74
    %v267 = vunpack.c.l.b16 %v75
    %v268 = vunpack.c.h.b16 %v75
    %v269 = vunpack.c.l.b16 %v76
    %v270 = vunpack.c.h.b16 %v76
    %v271 = vunpack.c.l.b16 %v77
    %v272 = vunpack.c.h.b16 %v77
    %v273 = vunpack.c.l.b16 %v78
    %v274 = vunpack.c.h.b16 %v78
    %v275 = vunpack.c.l.b16 %v79
    %v276 = vunpack.c.h.b16 %v79
    %v277 = vunpack.c.l.b16 %v80
    %v278 = vunpack.c.h.b16 %v80
    %v279 = vunpack.c.l.b16 %v81
    %v280 = vunpack.c.h.b16 %v81
    %v281 = vunpack.c.l.b16 %v82
    %v282 = vunpack.c.h.b16 %v82
    %v283 = vunpack.c.l.b16 %v83
    %v284 = vunpack.c.h.b16 %v83
    %v285 = vunpack.c.l.b16 %v84
    %v286 = vunpack.c.h.b16 %v84
    %v287 = vpack.c.b16 %v163, %v159
    %v288 = vpack.c.b16 %v164, %v160
    %v289 = vpack.c.b16 %v165, %v161
    %v290 = vpack.c.b16 %v166, %v162
    %v291 = vpack.c.b16 %v171, %v167
    %v292 = vpack.c.b16 %v172, %v168
    %v293 = vpack.c.b16 %v173, %v169
    %v294 = vpack.c.b16 %v174, %v170
    %v295 = vpack.c.b16 %v179, %v175
    %v296 = vpack.c.b16 %v180, %v176
    %v297 = vpack.c.b16 %v181, %v177
    %v298 = vpack.c.b16 %v182, %v178
    %v299 = vpack.c.b16 %v187, %v183
    %v300 = vpack.c.b16 %v188, %v184
    %v301 = vpack.c.b16 %v189, %v185
    %v302 = vpack.c.b16 %v190, %v186
    %v303 = vpack.c.b16 %v195, %v191
    %v304 = vpack.c.b16 %v196, %v192
    %v305 = vpack.c.b16 %v197, %v193
    %v306 = vpack.c.b16 %v198, %v194
    %v307 = vpack.c.b16 %v203, %v199
    %v308 = vpack.c.b16 %v204, %v200
    %v309 = vpack.c.b16 %v205, %v201
    %v310 = vpack.c.b16 %v206, %v202
    %v311 = vpack.c.b16 %v211, %v207
    %v312 = vpack.c.b16 %v212, %v208
    %v313 = vpack.c.b16 %v213, %v209
    %v314 = vpack.c.b16 %v214, %v210
    %v315 = vpack.c.b16 %v219, %v215
    %v316 = vpack.c.b16 %v220, %v216
    %v317 = vpack.c.b16 %v221, %v217
    %v318 = vpack.c.b16 %v222, %v218
    %v319 = vpack.c.b16 %v227, %v223
    %v320 = vpack.c.b16 %v228, %v224
    %v321 = vpack.c.b16 %v229, %v225
    %v322 = vpack.c.b16 %v230, %v226
    %v323 = vpack.c.b16 %v235, %v231
    %v324 = vpack.c.b16 %v236, %v232
    %v325 = vpack.c.b16 %v237, %v233
    %v326 = vpack.c.b16 %v238, %v234
    %v327 = vpack.c.b16 %v243, %v239
    %v328 = vpack.c.b16 %v244, %v240
    %v329 = vpack.c.b16 %v245, %v241
    %v330 = vpack.c.b16 %v246, %v242
    %v331 = vpack.c.b16 %v251, %v247
    %v332 = vpack.c.b16 %v252, %v248
    %v333 = vpack.c.b16 %v253, %v249
    %v334 = vpack.c.b16 %v254, %v250
    %v335 = vpack.c.b16 %v259, %v255
    %v336 = vpack.c.b16 %v260, %v256
    %v337 = vpack.c.b16 %v261, %v257
    %v338 = vpack.c.b16 %v262, %v258
    %v339 = vpack.c.b16 %v267, %v263
    %v340 = vpack.c.b16 %v268, %v264
    %v341 = vpack.c.b16 %v269, %v265
    %v342 = vpack.c.b16 %v270, %v266
    %v343 = vpack.c.b16 %v275, %v271
    %v344 = vpack.c.b16 %v276, %v272
    %v345 = vpack.c.b16 %v277, %v273
    %v346 = vpack.c.b16 %v278, %v274
    %v347 = vpack.c.b16 %v283, %v279
    %v348 = vpack.c.b16 %v284, %v280
    %v349 = vpack.c.b16 %v285, %v281
    %v350 = vpack.c.b16 %v286, %v282
    %415 = vmatprep.subr.bf16.mxu0 %v288
    %416 = vmatpush1.bf16.msra.mxu0 %v287
    %417 = vmatprep.subr.bf16.mxu0 %v292
    %418 = vmatpush1.bf16.msra.mxu0 %v291
    %419 = vmatprep.subr.bf16.mxu0 %v296
    %420 = vmatpush1.bf16.msra.mxu0 %v295
    %421 = vmatprep.subr.bf16.mxu0 %v300
    %422 = vmatpush1.bf16.msra.mxu0 %v299
    %423 = vmatprep.subr.bf16.mxu0 %v304
    %424 = vmatpush1.bf16.msra.mxu0 %v303
    %425 = vmatprep.subr.bf16.mxu0 %v308
    %426 = vmatpush1.bf16.msra.mxu0 %v307
    %427 = vmatprep.subr.bf16.mxu0 %v312
    %428 = vmatpush1.bf16.msra.mxu0 %v311
    %429 = vmatprep.subr.bf16.mxu0 %v316
    %430 = vmatpush1.bf16.msra.mxu0 %v315
    %431 = vmatprep.subr.bf16.mxu0 %v320
    %432 = vmatpush1.bf16.msra.mxu0 %v319
    %433 = vmatprep.subr.bf16.mxu0 %v324
    %434 = vmatpush1.bf16.msra.mxu0 %v323
    %435 = vmatprep.subr.bf16.mxu0 %v328
    %436 = vmatpush1.bf16.msra.mxu0 %v327
    %437 = vmatprep.subr.bf16.mxu0 %v332
    %438 = vmatpush1.bf16.msra.mxu0 %v331
    %439 = vmatprep.subr.bf16.mxu0 %v336
    %440 = vmatpush1.bf16.msra.mxu0 %v335
    %441 = vmatprep.subr.bf16.mxu0 %v340
    %442 = vmatpush1.bf16.msra.mxu0 %v339
    %443 = vmatprep.subr.bf16.mxu0 %v344
    %444 = vmatpush1.bf16.msra.mxu0 %v343
    %445 = vmatprep.subr.bf16.mxu0 %v348
    %446 = vmatpush1.bf16.msra.mxu0 %v347
    %447 = vmatprep.mubr.bf16.mxu0 %v92
    %448 = vmatmul.mubr.bf16.gmra.mrb[0].mxu0 %v91
    %v449 = vpop.f32.mrb[0].mxu0
    %v450 = vadd.f32 0.0, %v449
    %v451 = vpop.f32.mrb[0].mxu0
    %v452 = vadd.f32 0.0, %v451
    %v453 = vpop.f32.mrb[0].mxu0
    %v454 = vadd.f32 0.0, %v453
    %v455 = vpop.f32.mrb[0].mxu0
    %v456 = vadd.f32 0.0, %v455
    %457 = vdwg.mxu0
    %458 = vmatprep.subr.bf16.mxu0 %v290
    %459 = vmatpush1.bf16.msra.mxu0 %v289
    %460 = vmatprep.subr.bf16.mxu0 %v294
    %461 = vmatpush1.bf16.msra.mxu0 %v293
    %462 = vmatprep.subr.bf16.mxu0 %v298
    %463 = vmatpush1.bf16.msra.mxu0 %v297
    %464 = vmatprep.subr.bf16.mxu0 %v302
    %465 = vmatpush1.bf16.msra.mxu0 %v301
    %466 = vmatprep.subr.bf16.mxu0 %v306
    %467 = vmatpush1.bf16.msra.mxu0 %v305
    %468 = vmatprep.subr.bf16.mxu0 %v310
    %469 = vmatpush1.bf16.msra.mxu0 %v309
    %470 = vmatprep.subr.bf16.mxu0 %v314
    %471 = vmatpush1.bf16.msra.mxu0 %v313
    %472 = vmatprep.subr.bf16.mxu0 %v318
    %473 = vmatpush1.bf16.msra.mxu0 %v317
    %474 = vmatprep.subr.bf16.mxu0 %v322
    %475 = vmatpush1.bf16.msra.mxu0 %v321
    %476 = vmatprep.subr.bf16.mxu0 %v326
    %477 = vmatpush1.bf16.msra.mxu0 %v325
    %478 = vmatprep.subr.bf16.mxu0 %v330
    %479 = vmatpush1.bf16.msra.mxu0 %v329
    %480 = vmatprep.subr.bf16.mxu0 %v334
    %481 = vmatpush1.bf16.msra.mxu0 %v333
    %482 = vmatprep.subr.bf16.mxu0 %v338
    %483 = vmatpush1.bf16.msra.mxu0 %v337
    %484 = vmatprep.subr.bf16.mxu0 %v342
    %485 = vmatpush1.bf16.msra.mxu0 %v341
    %486 = vmatprep.subr.bf16.mxu0 %v346
    %487 = vmatpush1.bf16.msra.mxu0 %v345
    %488 = vmatprep.subr.bf16.mxu0 %v350
    %489 = vmatpush1.bf16.msra.mxu0 %v349
    %490 = vmatprep.mubr.bf16.mxu0 %v92
    %491 = vmatmul.mubr.bf16.gmra.mrb[0].mxu0 %v91
    %v492 = vpop.f32.mrb[0].mxu0
    %v493 = vadd.f32 0.0, %v492
    %v494 = vpop.f32.mrb[0].mxu0
    %v495 = vadd.f32 0.0, %v494
    %v496 = vpop.f32.mrb[0].mxu0
    %v497 = vadd.f32 0.0, %v496
    %v498 = vpop.f32.mrb[0].mxu0
    %v499 = vadd.f32 0.0, %v498
    %500 = vdwg.mxu0
    %v501 = vmul.f32 %v450, %v452
    %v502 = vmul.f32 %v454, %v456
    %vm503 = vcmask 261120
    %v504 = vsel %vm503, %v501, 0.0
    %505 = vadd.xlane.f32.xlu0 %v504
    %v506 = vpop.xlane.xlu0 %505
    %v507 = vsel %vm503, %v502, 0.0
    %508 = vadd.xlane.f32.xlu0 %v507
    %v509 = vpop.xlane.xlu0 %508
    %512 = vrot.lane.b32.xlu0 %v452, 96
    %v513 = vpop.permute.xlu0 %512
    %514 = vrot.lane.b32.xlu0 %v456, 96
    %v515 = vpop.permute.xlu0 %514
    %v518 = vmul.f32 %v450, %v513
    %v519 = vmul.f32 %v454, %v515
    %v520 = vsel %vm503, %v518, 0.0
    %521 = vadd.xlane.f32.xlu0 %v520
    %v522 = vpop.xlane.xlu0 %521
    %v523 = vsel %vm503, %v519, 0.0
    %524 = vadd.xlane.f32.xlu0 %v523
    %v525 = vpop.xlane.xlu0 %524
    %526 = vrot.lane.b32.xlu0 %v452, 64
    %v527 = vpop.permute.xlu0 %526
    %528 = vrot.lane.b32.xlu0 %v456, 64
    %v529 = vpop.permute.xlu0 %528
    %v532 = vmul.f32 %v450, %v527
    %v533 = vmul.f32 %v454, %v529
    %v534 = vsel %vm503, %v532, 0.0
    %535 = vadd.xlane.f32.xlu0 %v534
    %v536 = vpop.xlane.xlu0 %535
    %v537 = vsel %vm503, %v533, 0.0
    %538 = vadd.xlane.f32.xlu0 %v537
    %v539 = vpop.xlane.xlu0 %538
    %540 = vrot.lane.b32.xlu0 %v452, 32
    %v541 = vpop.permute.xlu0 %540
    %542 = vrot.lane.b32.xlu0 %v456, 32
    %v543 = vpop.permute.xlu0 %542
    %v546 = vmul.f32 %v450, %v541
    %v547 = vmul.f32 %v454, %v543
    %v548 = vsel %vm503, %v546, 0.0
    %549 = vadd.xlane.f32.xlu0 %v548
    %v550 = vpop.xlane.xlu0 %549
    %v551 = vsel %vm503, %v547, 0.0
    %552 = vadd.xlane.f32.xlu0 %v551
    %v553 = vpop.xlane.xlu0 %552
    %v554 = vmax.f32 %v506, %v522
    %v555 = vmax.f32 %v509, %v525
    %v556 = vmax.f32 %v554, %v536
    %v557 = vmax.f32 %v555, %v539
    %v558 = vmax.f32 %v556, %v550
    %v559 = vmax.f32 %v557, %v553
    %v560 = vsub.f32 %v506, %v558
    %v561 = vsub.f32 %v509, %v559
    %v562 = vmul.f32 %v560, 1.442695
    %v563 = vpow.pop %v562
    %v564 = vmul.f32 %v561, 1.442695
    %v565 = vpow.pop %v564
    %v566 = vsub.f32 %v522, %v558
    %v567 = vsub.f32 %v525, %v559
    %v568 = vmul.f32 %v566, 1.442695
    %v569 = vpow.pop %v568
    %v570 = vmul.f32 %v567, 1.442695
    %v571 = vpow.pop %v570
    %v572 = vsub.f32 %v536, %v558
    %v573 = vsub.f32 %v539, %v559
    %v574 = vmul.f32 %v572, 1.442695
    %v575 = vpow.pop %v574
    %v576 = vmul.f32 %v573, 1.442695
    %v577 = vpow.pop %v576
    %v578 = vsub.f32 %v550, %v558
    %v579 = vsub.f32 %v553, %v559
    %v580 = vmul.f32 %v578, 1.442695
    %v581 = vpow.pop %v580
    %v582 = vmul.f32 %v579, 1.442695
    %v583 = vpow.pop %v582
    %v584 = vadd.f32 %v563, %v569
    %v585 = vadd.f32 %v565, %v571
    %v586 = vadd.f32 %v584, %v575
    %v587 = vadd.f32 %v585, %v577
    %v588 = vadd.f32 %v586, %v581
    %v589 = vadd.f32 %v587, %v583
    %v590 = vrcp.pop %v588
    %v591 = vrcp.pop %v589
    %v592 = vmul.f32 %v563, %v590
    %v593 = vmul.f32 %v565, %v591
    %v594 = vmul.f32 %v592, %v493
    %v595 = vmul.f32 %v593, %v497
    %v596 = vmul.f32 %v569, %v590
    %v597 = vmul.f32 %v571, %v591
    %v598 = vmul.f32 %v596, %v493
    %v599 = vmul.f32 %v597, %v497
    %602 = vrot.lane.b32.xlu0 %v598, 96
    %v603 = vpop.permute.xlu0 %602
    %604 = vrot.lane.b32.xlu0 %v599, 96
    %v605 = vpop.permute.xlu0 %604
    %v608 = vadd.f32 %v594, %v603
    %v609 = vadd.f32 %v595, %v605
    %v610 = vmul.f32 %v575, %v590
    %v611 = vmul.f32 %v577, %v591
    %v612 = vmul.f32 %v610, %v493
    %v613 = vmul.f32 %v611, %v497
    %616 = vrot.lane.b32.xlu0 %v612, 64
    %v617 = vpop.permute.xlu0 %616
    %618 = vrot.lane.b32.xlu0 %v613, 64
    %v619 = vpop.permute.xlu0 %618
    %v622 = vadd.f32 %v608, %v617
    %v623 = vadd.f32 %v609, %v619
    %v624 = vmul.f32 %v581, %v590
    %v625 = vmul.f32 %v583, %v591
    %v626 = vmul.f32 %v624, %v493
    %v627 = vmul.f32 %v625, %v497
    %630 = vrot.lane.b32.xlu0 %v626, 32
    %v631 = vpop.permute.xlu0 %630
    %632 = vrot.lane.b32.xlu0 %v627, 32
    %v633 = vpop.permute.xlu0 %632
    %v636 = vadd.f32 %v622, %v631
    %v637 = vadd.f32 %v623, %v633
    %640 = vrot.lane.b32.xlu0 %v546, 96
    %v641 = vpop.permute.xlu0 %640
    %642 = vrot.lane.b32.xlu0 %v547, 96
    %v643 = vpop.permute.xlu0 %642
    %v646 = vsel %vm503, %v641, 0.0
    %647 = vadd.xlane.f32.xlu0 %v646
    %v648 = vpop.xlane.xlu0 %647
    %v649 = vsel %vm503, %v643, 0.0
    %650 = vadd.xlane.f32.xlu0 %v649
    %v651 = vpop.xlane.xlu0 %650
    %654 = vrot.lane.b32.xlu0 %v501, 96
    %v655 = vpop.permute.xlu0 %654
    %656 = vrot.lane.b32.xlu0 %v502, 96
    %v657 = vpop.permute.xlu0 %656
    %v660 = vsel %vm503, %v655, 0.0
    %661 = vadd.xlane.f32.xlu0 %v660
    %v662 = vpop.xlane.xlu0 %661
    %v663 = vsel %vm503, %v657, 0.0
    %664 = vadd.xlane.f32.xlu0 %v663
    %v665 = vpop.xlane.xlu0 %664
    %668 = vrot.lane.b32.xlu0 %v518, 96
    %v669 = vpop.permute.xlu0 %668
    %670 = vrot.lane.b32.xlu0 %v519, 96
    %v671 = vpop.permute.xlu0 %670
    %v674 = vsel %vm503, %v669, 0.0
    %675 = vadd.xlane.f32.xlu0 %v674
    %v676 = vpop.xlane.xlu0 %675
    %v677 = vsel %vm503, %v671, 0.0
    %678 = vadd.xlane.f32.xlu0 %v677
    %v679 = vpop.xlane.xlu0 %678
    %682 = vrot.lane.b32.xlu0 %v532, 96
    %v683 = vpop.permute.xlu0 %682
    %684 = vrot.lane.b32.xlu0 %v533, 96
    %v685 = vpop.permute.xlu0 %684
    %v688 = vsel %vm503, %v683, 0.0
    %689 = vadd.xlane.f32.xlu0 %v688
    %v690 = vpop.xlane.xlu0 %689
    %v691 = vsel %vm503, %v685, 0.0
    %692 = vadd.xlane.f32.xlu0 %v691
    %v693 = vpop.xlane.xlu0 %692
    %v694 = vmax.f32 %v648, %v662
    %v695 = vmax.f32 %v651, %v665
    %v696 = vmax.f32 %v694, %v676
    %v697 = vmax.f32 %v695, %v679
    %v698 = vmax.f32 %v696, %v690
    %v699 = vmax.f32 %v697, %v693
    %v700 = vsub.f32 %v648, %v698
    %v701 = vsub.f32 %v651, %v699
    %v702 = vmul.f32 %v700, 1.442695
    %v703 = vpow.pop %v702
    %v704 = vmul.f32 %v701, 1.442695
    %v705 = vpow.pop %v704
    %v706 = vsub.f32 %v662, %v698
    %v707 = vsub.f32 %v665, %v699
    %v708 = vmul.f32 %v706, 1.442695
    %v709 = vpow.pop %v708
    %v710 = vmul.f32 %v707, 1.442695
    %v711 = vpow.pop %v710
    %v712 = vsub.f32 %v676, %v698
    %v713 = vsub.f32 %v679, %v699
    %v714 = vmul.f32 %v712, 1.442695
    %v715 = vpow.pop %v714
    %v716 = vmul.f32 %v713, 1.442695
    %v717 = vpow.pop %v716
    %v718 = vsub.f32 %v690, %v698
    %v719 = vsub.f32 %v693, %v699
    %v720 = vmul.f32 %v718, 1.442695
    %v721 = vpow.pop %v720
    %v722 = vmul.f32 %v719, 1.442695
    %v723 = vpow.pop %v722
    %v724 = vadd.f32 %v703, %v709
    %v725 = vadd.f32 %v705, %v711
    %v726 = vadd.f32 %v724, %v715
    %v727 = vadd.f32 %v725, %v717
    %v728 = vadd.f32 %v726, %v721
    %v729 = vadd.f32 %v727, %v723
    %v730 = vrcp.pop %v728
    %v731 = vrcp.pop %v729
    %v732 = vmul.f32 %v703, %v730
    %v733 = vmul.f32 %v705, %v731
    %v734 = vmul.f32 %v732, %v493
    %v735 = vmul.f32 %v733, %v497
    %v736 = vmul.f32 %v709, %v730
    %v737 = vmul.f32 %v711, %v731
    %v738 = vmul.f32 %v736, %v493
    %v739 = vmul.f32 %v737, %v497
    %742 = vrot.lane.b32.xlu0 %v738, 96
    %v743 = vpop.permute.xlu0 %742
    %744 = vrot.lane.b32.xlu0 %v739, 96
    %v745 = vpop.permute.xlu0 %744
    %v748 = vadd.f32 %v734, %v743
    %v749 = vadd.f32 %v735, %v745
    %v750 = vmul.f32 %v715, %v730
    %v751 = vmul.f32 %v717, %v731
    %v752 = vmul.f32 %v750, %v493
    %v753 = vmul.f32 %v751, %v497
    %756 = vrot.lane.b32.xlu0 %v752, 64
    %v757 = vpop.permute.xlu0 %756
    %758 = vrot.lane.b32.xlu0 %v753, 64
    %v759 = vpop.permute.xlu0 %758
    %v762 = vadd.f32 %v748, %v757
    %v763 = vadd.f32 %v749, %v759
    %v764 = vmul.f32 %v721, %v730
    %v765 = vmul.f32 %v723, %v731
    %v766 = vmul.f32 %v764, %v493
    %v767 = vmul.f32 %v765, %v497
    %770 = vrot.lane.b32.xlu0 %v766, 32
    %v771 = vpop.permute.xlu0 %770
    %772 = vrot.lane.b32.xlu0 %v767, 32
    %v773 = vpop.permute.xlu0 %772
    %v776 = vadd.f32 %v762, %v771
    %v777 = vadd.f32 %v763, %v773
    %778 = vrot.lane.b32.xlu0 %v532, 64
    %v779 = vpop.permute.xlu0 %778
    %780 = vrot.lane.b32.xlu0 %v533, 64
    %v781 = vpop.permute.xlu0 %780
    %v784 = vsel %vm503, %v779, 0.0
    %785 = vadd.xlane.f32.xlu0 %v784
    %v786 = vpop.xlane.xlu0 %785
    %v787 = vsel %vm503, %v781, 0.0
    %788 = vadd.xlane.f32.xlu0 %v787
    %v789 = vpop.xlane.xlu0 %788
    %790 = vrot.lane.b32.xlu0 %v546, 64
    %v791 = vpop.permute.xlu0 %790
    %792 = vrot.lane.b32.xlu0 %v547, 64
    %v793 = vpop.permute.xlu0 %792
    %v796 = vsel %vm503, %v791, 0.0
    %797 = vadd.xlane.f32.xlu0 %v796
    %v798 = vpop.xlane.xlu0 %797
    %v799 = vsel %vm503, %v793, 0.0
    %800 = vadd.xlane.f32.xlu0 %v799
    %v801 = vpop.xlane.xlu0 %800
    %802 = vrot.lane.b32.xlu0 %v501, 64
    %v803 = vpop.permute.xlu0 %802
    %804 = vrot.lane.b32.xlu0 %v502, 64
    %v805 = vpop.permute.xlu0 %804
    %v808 = vsel %vm503, %v803, 0.0
    %809 = vadd.xlane.f32.xlu0 %v808
    %v810 = vpop.xlane.xlu0 %809
    %v811 = vsel %vm503, %v805, 0.0
    %812 = vadd.xlane.f32.xlu0 %v811
    %v813 = vpop.xlane.xlu0 %812
    %814 = vrot.lane.b32.xlu0 %v518, 64
    %v815 = vpop.permute.xlu0 %814
    %816 = vrot.lane.b32.xlu0 %v519, 64
    %v817 = vpop.permute.xlu0 %816
    %v820 = vsel %vm503, %v815, 0.0
    %821 = vadd.xlane.f32.xlu0 %v820
    %v822 = vpop.xlane.xlu0 %821
    %v823 = vsel %vm503, %v817, 0.0
    %824 = vadd.xlane.f32.xlu0 %v823
    %v825 = vpop.xlane.xlu0 %824
    %v826 = vmax.f32 %v786, %v798
    %v827 = vmax.f32 %v789, %v801
    %v828 = vmax.f32 %v826, %v810
    %v829 = vmax.f32 %v827, %v813
    %v830 = vmax.f32 %v828, %v822
    %v831 = vmax.f32 %v829, %v825
    %v832 = vsub.f32 %v786, %v830
    %v833 = vsub.f32 %v789, %v831
    %v834 = vmul.f32 %v832, 1.442695
    %v835 = vpow.pop %v834
    %v836 = vmul.f32 %v833, 1.442695
    %v837 = vpow.pop %v836
    %v838 = vsub.f32 %v798, %v830
    %v839 = vsub.f32 %v801, %v831
    %v840 = vmul.f32 %v838, 1.442695
    %v841 = vpow.pop %v840
    %v842 = vmul.f32 %v839, 1.442695
    %v843 = vpow.pop %v842
    %v844 = vsub.f32 %v810, %v830
    %v845 = vsub.f32 %v813, %v831
    %v846 = vmul.f32 %v844, 1.442695
    %v847 = vpow.pop %v846
    %v848 = vmul.f32 %v845, 1.442695
    %v849 = vpow.pop %v848
    %v850 = vsub.f32 %v822, %v830
    %v851 = vsub.f32 %v825, %v831
    %v852 = vmul.f32 %v850, 1.442695
    %v853 = vpow.pop %v852
    %v854 = vmul.f32 %v851, 1.442695
    %v855 = vpow.pop %v854
    %v856 = vadd.f32 %v835, %v841
    %v857 = vadd.f32 %v837, %v843
    %v858 = vadd.f32 %v856, %v847
    %v859 = vadd.f32 %v857, %v849
    %v860 = vadd.f32 %v858, %v853
    %v861 = vadd.f32 %v859, %v855
    %v862 = vrcp.pop %v860
    %v863 = vrcp.pop %v861
    %v864 = vmul.f32 %v835, %v862
    %v865 = vmul.f32 %v837, %v863
    %v866 = vmul.f32 %v864, %v493
    %v867 = vmul.f32 %v865, %v497
    %v868 = vmul.f32 %v841, %v862
    %v869 = vmul.f32 %v843, %v863
    %v870 = vmul.f32 %v868, %v493
    %v871 = vmul.f32 %v869, %v497
    %874 = vrot.lane.b32.xlu0 %v870, 96
    %v875 = vpop.permute.xlu0 %874
    %876 = vrot.lane.b32.xlu0 %v871, 96
    %v877 = vpop.permute.xlu0 %876
    %v880 = vadd.f32 %v866, %v875
    %v881 = vadd.f32 %v867, %v877
    %v882 = vmul.f32 %v847, %v862
    %v883 = vmul.f32 %v849, %v863
    %v884 = vmul.f32 %v882, %v493
    %v885 = vmul.f32 %v883, %v497
    %888 = vrot.lane.b32.xlu0 %v884, 64
    %v889 = vpop.permute.xlu0 %888
    %890 = vrot.lane.b32.xlu0 %v885, 64
    %v891 = vpop.permute.xlu0 %890
    %v894 = vadd.f32 %v880, %v889
    %v895 = vadd.f32 %v881, %v891
    %v896 = vmul.f32 %v853, %v862
    %v897 = vmul.f32 %v855, %v863
    %v898 = vmul.f32 %v896, %v493
    %v899 = vmul.f32 %v897, %v497
    %902 = vrot.lane.b32.xlu0 %v898, 32
    %v903 = vpop.permute.xlu0 %902
    %904 = vrot.lane.b32.xlu0 %v899, 32
    %v905 = vpop.permute.xlu0 %904
    %v908 = vadd.f32 %v894, %v903
    %v909 = vadd.f32 %v895, %v905
    %910 = vrot.lane.b32.xlu0 %v518, 32
    %v911 = vpop.permute.xlu0 %910
    %912 = vrot.lane.b32.xlu0 %v519, 32
    %v913 = vpop.permute.xlu0 %912
    %v916 = vsel %vm503, %v911, 0.0
    %917 = vadd.xlane.f32.xlu0 %v916
    %v918 = vpop.xlane.xlu0 %917
    %v919 = vsel %vm503, %v913, 0.0
    %920 = vadd.xlane.f32.xlu0 %v919
    %v921 = vpop.xlane.xlu0 %920
    %922 = vrot.lane.b32.xlu0 %v532, 32
    %v923 = vpop.permute.xlu0 %922
    %924 = vrot.lane.b32.xlu0 %v533, 32
    %v925 = vpop.permute.xlu0 %924
    %v928 = vsel %vm503, %v923, 0.0
    %929 = vadd.xlane.f32.xlu0 %v928
    %v930 = vpop.xlane.xlu0 %929
    %v931 = vsel %vm503, %v925, 0.0
    %932 = vadd.xlane.f32.xlu0 %v931
    %v933 = vpop.xlane.xlu0 %932
    %934 = vrot.lane.b32.xlu0 %v546, 32
    %v935 = vpop.permute.xlu0 %934
    %936 = vrot.lane.b32.xlu0 %v547, 32
    %v937 = vpop.permute.xlu0 %936
    %v940 = vsel %vm503, %v935, 0.0
    %941 = vadd.xlane.f32.xlu0 %v940
    %v942 = vpop.xlane.xlu0 %941
    %v943 = vsel %vm503, %v937, 0.0
    %944 = vadd.xlane.f32.xlu0 %v943
    %v945 = vpop.xlane.xlu0 %944
    %946 = vrot.lane.b32.xlu0 %v501, 32
    %v947 = vpop.permute.xlu0 %946
    %948 = vrot.lane.b32.xlu0 %v502, 32
    %v949 = vpop.permute.xlu0 %948
    %v952 = vsel %vm503, %v947, 0.0
    %953 = vadd.xlane.f32.xlu0 %v952
    %v954 = vpop.xlane.xlu0 %953
    %v955 = vsel %vm503, %v949, 0.0
    %956 = vadd.xlane.f32.xlu0 %v955
    %v957 = vpop.xlane.xlu0 %956
    %v958 = vmax.f32 %v918, %v930
    %v959 = vmax.f32 %v921, %v933
    %v960 = vmax.f32 %v958, %v942
    %v961 = vmax.f32 %v959, %v945
    %v962 = vmax.f32 %v960, %v954
    %v963 = vmax.f32 %v961, %v957
    %v964 = vsub.f32 %v918, %v962
    %v965 = vsub.f32 %v921, %v963
    %v966 = vmul.f32 %v964, 1.442695
    %v967 = vpow.pop %v966
    %v968 = vmul.f32 %v965, 1.442695
    %v969 = vpow.pop %v968
    %v970 = vsub.f32 %v930, %v962
    %v971 = vsub.f32 %v933, %v963
    %v972 = vmul.f32 %v970, 1.442695
    %v973 = vpow.pop %v972
    %v974 = vmul.f32 %v971, 1.442695
    %v975 = vpow.pop %v974
    %v976 = vsub.f32 %v942, %v962
    %v977 = vsub.f32 %v945, %v963
    %v978 = vmul.f32 %v976, 1.442695
    %v979 = vpow.pop %v978
    %v980 = vmul.f32 %v977, 1.442695
    %v981 = vpow.pop %v980
    %v982 = vsub.f32 %v954, %v962
    %v983 = vsub.f32 %v957, %v963
    %v984 = vmul.f32 %v982, 1.442695
    %v985 = vpow.pop %v984
    %v986 = vmul.f32 %v983, 1.442695
    %v987 = vpow.pop %v986
    %v988 = vadd.f32 %v967, %v973
    %v989 = vadd.f32 %v969, %v975
    %v990 = vadd.f32 %v988, %v979
    %v991 = vadd.f32 %v989, %v981
    %v992 = vadd.f32 %v990, %v985
    %v993 = vadd.f32 %v991, %v987
    %v994 = vrcp.pop %v992
    %v995 = vrcp.pop %v993
    %v996 = vmul.f32 %v967, %v994
    %v997 = vmul.f32 %v969, %v995
    %v998 = vmul.f32 %v996, %v493
    %v999 = vmul.f32 %v997, %v497
    %v1000 = vmul.f32 %v973, %v994
    %v1001 = vmul.f32 %v975, %v995
    %v1002 = vmul.f32 %v1000, %v493
    %v1003 = vmul.f32 %v1001, %v497
    %1006 = vrot.lane.b32.xlu0 %v1002, 96
    %v1007 = vpop.permute.xlu0 %1006
    %1008 = vrot.lane.b32.xlu0 %v1003, 96
    %v1009 = vpop.permute.xlu0 %1008
    %v1012 = vadd.f32 %v998, %v1007
    %v1013 = vadd.f32 %v999, %v1009
    %v1014 = vmul.f32 %v979, %v994
    %v1015 = vmul.f32 %v981, %v995
    %v1016 = vmul.f32 %v1014, %v493
    %v1017 = vmul.f32 %v1015, %v497
    %1020 = vrot.lane.b32.xlu0 %v1016, 64
    %v1021 = vpop.permute.xlu0 %1020
    %1022 = vrot.lane.b32.xlu0 %v1017, 64
    %v1023 = vpop.permute.xlu0 %1022
    %v1026 = vadd.f32 %v1012, %v1021
    %v1027 = vadd.f32 %v1013, %v1023
    %v1028 = vmul.f32 %v985, %v994
    %v1029 = vmul.f32 %v987, %v995
    %v1030 = vmul.f32 %v1028, %v493
    %v1031 = vmul.f32 %v1029, %v497
    %1034 = vrot.lane.b32.xlu0 %v1030, 32
    %v1035 = vpop.permute.xlu0 %1034
    %1036 = vrot.lane.b32.xlu0 %v1031, 32
    %v1037 = vpop.permute.xlu0 %1036
    %v1040 = vadd.f32 %v1026, %v1035
    %v1041 = vadd.f32 %v1027, %v1037
    %1044 = vrot.lane.b32.xlu0 %v776, 32
    %v1045 = vpop.permute.xlu0 %1044
    %1046 = vrot.lane.b32.xlu0 %v777, 32
    %v1047 = vpop.permute.xlu0 %1046
    %1052 = vrot.lane.b32.xlu0 %v908, 64
    %v1053 = vpop.permute.xlu0 %1052
    %1054 = vrot.lane.b32.xlu0 %v909, 64
    %v1055 = vpop.permute.xlu0 %1054
    %1060 = vrot.lane.b32.xlu0 %v1040, 96
    %v1061 = vpop.permute.xlu0 %1060
    %1062 = vrot.lane.b32.xlu0 %v1041, 96
    %v1063 = vpop.permute.xlu0 %1062
    %v1066 = vsel %vm503, %v636, %v1045
    %v1067 = vsel %vm503, %v637, %v1047
    %vm1068 = vcmask 523264
    %v1069 = vsel %vm1068, %v1066, %v1053
    %v1070 = vsel %vm1068, %v1067, %v1055
    %vm1071 = vcmask 785408
    %v1072 = vsel %vm1071, %v1069, %v1061
    %v1073 = vsel %vm1071, %v1070, %v1063
    %v1074 = vpack.c.bf16 %v1073, %v1072
    %v1075 = vld [vmem:[%s2] sm:$0xf]
    %v1076 = vld [vmem:[%s2 + $0x4] sm:$0xf]
    %v1077 = vld [vmem:[%s2 + $0x8] sm:$0xf]
    %v1078 = vld [vmem:[%s2 + $0xc] sm:$0xf]
    %v1079 = vld [vmem:[%s2 + $0x10] sm:$0xf]
    %v1080 = vld [vmem:[%s2 + $0x14] sm:$0xf]
    %v1081 = vld [vmem:[%s2 + $0x18] sm:$0xf]
    %v1082 = vld [vmem:[%s2 + $0x1c] sm:$0xf]
    %v1083 = vld [vmem:[%s2 + $0x20] sm:$0xf]
    %v1084 = vld [vmem:[%s2 + $0x24] sm:$0xf]
    %v1085 = vld [vmem:[%s2 + $0x28] sm:$0xf]
    %v1086 = vld [vmem:[%s2 + $0x2c] sm:$0xf]
    %v1087 = vld [vmem:[%s2 + $0x30] sm:$0xf]
    %v1088 = vld [vmem:[%s2 + $0x34] sm:$0xf]
    %v1089 = vld [vmem:[%s2 + $0x38] sm:$0xf]
    %v1090 = vld [vmem:[%s2 + $0x3c] sm:$0xf]
    %v1107 = vunpack.c.l.b16 %v1075
    %v1108 = vunpack.c.l.b16 %v1076
    %v1109 = vunpack.c.l.b16 %v1077
    %v1110 = vunpack.c.l.b16 %v1078
    %v1111 = vunpack.c.l.b16 %v1079
    %v1112 = vunpack.c.l.b16 %v1080
    %v1113 = vunpack.c.l.b16 %v1081
    %v1114 = vunpack.c.l.b16 %v1082
    %v1115 = vunpack.c.l.b16 %v1083
    %v1116 = vunpack.c.l.b16 %v1084
    %v1117 = vunpack.c.l.b16 %v1085
    %v1118 = vunpack.c.l.b16 %v1086
    %v1119 = vunpack.c.l.b16 %v1087
    %v1120 = vunpack.c.l.b16 %v1088
    %v1121 = vunpack.c.l.b16 %v1089
    %v1122 = vunpack.c.l.b16 %v1090
    %v1123 = vpack.c.b16 %v1108, %v1107
    %v1124 = vpack.c.b16 %v1110, %v1109
    %v1125 = vpack.c.b16 %v1112, %v1111
    %v1126 = vpack.c.b16 %v1114, %v1113
    %v1127 = vpack.c.b16 %v1116, %v1115
    %v1128 = vpack.c.b16 %v1118, %v1117
    %v1129 = vpack.c.b16 %v1120, %v1119
    %v1130 = vpack.c.b16 %v1122, %v1121
    %1139 = vmatprep.subr.bf16.mxu0 0
    %1140 = vmatpush1.bf16.msra.mxu0 %v1123
    %1141 = vmatprep.subr.bf16.mxu0 0
    %1142 = vmatpush1.bf16.msra.mxu0 %v1124
    %1143 = vmatprep.subr.bf16.mxu0 0
    %1144 = vmatpush1.bf16.msra.mxu0 %v1125
    %1145 = vmatprep.subr.bf16.mxu0 0
    %1146 = vmatpush1.bf16.msra.mxu0 %v1126
    %1147 = vmatprep.subr.bf16.mxu0 0
    %1148 = vmatpush1.bf16.msra.mxu0 %v1127
    %1149 = vmatprep.subr.bf16.mxu0 0
    %1150 = vmatpush1.bf16.msra.mxu0 %v1128
    %1151 = vmatprep.subr.bf16.mxu0 0
    %1152 = vmatpush1.bf16.msra.mxu0 %v1129
    %1153 = vmatprep.subr.bf16.mxu0 0
    %1154 = vmatpush1.bf16.msra.mxu0 %v1130
    %1155 = vmatprep.subr.bf16.mxu0 0
    %1156 = vmatpush1.bf16.msra.mxu0 0
    %1157 = vmatprep.subr.bf16.mxu0 0
    %1158 = vmatpush1.bf16.msra.mxu0 0
    %1159 = vmatprep.subr.bf16.mxu0 0
    %1160 = vmatpush1.bf16.msra.mxu0 0
    %1161 = vmatprep.subr.bf16.mxu0 0
    %1162 = vmatpush1.bf16.msra.mxu0 0
    %1163 = vmatprep.subr.bf16.mxu0 0
    %1164 = vmatpush1.bf16.msra.mxu0 0
    %1165 = vmatprep.subr.bf16.mxu0 0
    %1166 = vmatpush1.bf16.msra.mxu0 0
    %1167 = vmatprep.subr.bf16.mxu0 0
    %1168 = vmatpush1.bf16.msra.mxu0 0
    %1169 = vmatprep.subr.bf16.mxu0 0
    %1170 = vmatpush1.bf16.msra.mxu0 0
    %1171 = vmatprep.mubr.bf16.mxu0 0
    %1172 = vmatmul.mubr.bf16.gmra.mrb[0].mxu0 %v1074
    %v1173 = vpop.f32.mrb[0].mxu0
    %v1174 = vadd.f32 %v495, %v1173
    %v1175 = vpop.f32.mrb[0].mxu0
    %v1176 = vpop.f32.mrb[0].mxu0
    %v1177 = vadd.f32 %v499, %v1176
    %v1178 = vpop.f32.mrb[0].mxu0
    %1179 = vdwg.mxu0
    %v1180 = vmax.f32 %v1174, 0.0
    %v1181 = vmax.f32 %v1177, 0.0
    %v1182 = vpack.c.bf16 %v1181, %v1180
    %v1183 = vld [vmem:[%s3] sm:$0xff]
    %v1184 = vld [vmem:[%s3 + $0x8] sm:$0xff]
    %v1185 = vld [vmem:[%s3 + $0x10] sm:$0xff]
    %v1186 = vld [vmem:[%s3 + $0x18] sm:$0xff]
    %v1187 = vld [vmem:[%s3 + $0x20] sm:$0xff]
    %v1188 = vld [vmem:[%s3 + $0x28] sm:$0xff]
    %v1189 = vld [vmem:[%s3 + $0x30] sm:$0xff]
    %v1190 = vld [vmem:[%s3 + $0x38] sm:$0xff]
    %v1191 = vld [vmem:[%s3 + $0x40] sm:$0xff]
    %v1192 = vld [vmem:[%s3 + $0x48] sm:$0xff]
    %v1193 = vld [vmem:[%s3 + $0x50] sm:$0xff]
    %v1194 = vld [vmem:[%s3 + $0x58] sm:$0xff]
    %v1195 = vld [vmem:[%s3 + $0x60] sm:$0xff]
    %v1196 = vld [vmem:[%s3 + $0x68] sm:$0xff]
    %v1197 = vld [vmem:[%s3 + $0x70] sm:$0xff]
    %v1198 = vld [vmem:[%s3 + $0x78] sm:$0xff]
    %v1215 = vunpack.c.l.b16 %v1183
    %v1216 = vunpack.c.h.b16 %v1183
    %v1217 = vunpack.c.l.b16 %v1184
    %v1218 = vunpack.c.h.b16 %v1184
    %v1219 = vunpack.c.l.b16 %v1185
    %v1220 = vunpack.c.h.b16 %v1185
    %v1221 = vunpack.c.l.b16 %v1186
    %v1222 = vunpack.c.h.b16 %v1186
    %v1223 = vunpack.c.l.b16 %v1187
    %v1224 = vunpack.c.h.b16 %v1187
    %v1225 = vunpack.c.l.b16 %v1188
    %v1226 = vunpack.c.h.b16 %v1188
    %v1227 = vunpack.c.l.b16 %v1189
    %v1228 = vunpack.c.h.b16 %v1189
    %v1229 = vunpack.c.l.b16 %v1190
    %v1230 = vunpack.c.h.b16 %v1190
    %v1231 = vunpack.c.l.b16 %v1191
    %v1232 = vunpack.c.h.b16 %v1191
    %v1233 = vunpack.c.l.b16 %v1192
    %v1234 = vunpack.c.h.b16 %v1192
    %v1235 = vunpack.c.l.b16 %v1193
    %v1236 = vunpack.c.h.b16 %v1193
    %v1237 = vunpack.c.l.b16 %v1194
    %v1238 = vunpack.c.h.b16 %v1194
    %v1239 = vunpack.c.l.b16 %v1195
    %v1240 = vunpack.c.h.b16 %v1195
    %v1241 = vunpack.c.l.b16 %v1196
    %v1242 = vunpack.c.h.b16 %v1196
    %v1243 = vunpack.c.l.b16 %v1197
    %v1244 = vunpack.c.h.b16 %v1197
    %v1245 = vunpack.c.l.b16 %v1198
    %v1246 = vunpack.c.h.b16 %v1198
    %v1247 = vpack.c.b16 %v1217, %v1215
    %v1248 = vpack.c.b16 %v1218, %v1216
    %v1249 = vpack.c.b16 %v1221, %v1219
    %v1250 = vpack.c.b16 %v1222, %v1220
    %v1251 = vpack.c.b16 %v1225, %v1223
    %v1252 = vpack.c.b16 %v1226, %v1224
    %v1253 = vpack.c.b16 %v1229, %v1227
    %v1254 = vpack.c.b16 %v1230, %v1228
    %v1255 = vpack.c.b16 %v1233, %v1231
    %v1256 = vpack.c.b16 %v1234, %v1232
    %v1257 = vpack.c.b16 %v1237, %v1235
    %v1258 = vpack.c.b16 %v1238, %v1236
    %v1259 = vpack.c.b16 %v1241, %v1239
    %v1260 = vpack.c.b16 %v1242, %v1240
    %v1261 = vpack.c.b16 %v1245, %v1243
    %v1262 = vpack.c.b16 %v1246, %v1244
    %1279 = vmatprep.subr.bf16.mxu0 %v1248
    %1280 = vmatpush1.bf16.msra.mxu0 %v1247
    %1281 = vmatprep.subr.bf16.mxu0 %v1250
    %1282 = vmatpush1.bf16.msra.mxu0 %v1249
    %1283 = vmatprep.subr.bf16.mxu0 %v1252
    %1284 = vmatpush1.bf16.msra.mxu0 %v1251
    %1285 = vmatprep.subr.bf16.mxu0 %v1254
    %1286 = vmatpush1.bf16.msra.mxu0 %v1253
    %1287 = vmatprep.subr.bf16.mxu0 %v1256
    %1288 = vmatpush1.bf16.msra.mxu0 %v1255
    %1289 = vmatprep.subr.bf16.mxu0 %v1258
    %1290 = vmatpush1.bf16.msra.mxu0 %v1257
    %1291 = vmatprep.subr.bf16.mxu0 %v1260
    %1292 = vmatpush1.bf16.msra.mxu0 %v1259
    %1293 = vmatprep.subr.bf16.mxu0 %v1262
    %1294 = vmatpush1.bf16.msra.mxu0 %v1261
    %1295 = vmatprep.subr.bf16.mxu0 0
    %1296 = vmatpush1.bf16.msra.mxu0 0
    %1297 = vmatprep.subr.bf16.mxu0 0
    %1298 = vmatpush1.bf16.msra.mxu0 0
    %1299 = vmatprep.subr.bf16.mxu0 0
    %1300 = vmatpush1.bf16.msra.mxu0 0
    %1301 = vmatprep.subr.bf16.mxu0 0
    %1302 = vmatpush1.bf16.msra.mxu0 0
    %1303 = vmatprep.subr.bf16.mxu0 0
    %1304 = vmatpush1.bf16.msra.mxu0 0
    %1305 = vmatprep.subr.bf16.mxu0 0
    %1306 = vmatpush1.bf16.msra.mxu0 0
    %1307 = vmatprep.subr.bf16.mxu0 0
    %1308 = vmatpush1.bf16.msra.mxu0 0
    %1309 = vmatprep.subr.bf16.mxu0 0
    %1310 = vmatpush1.bf16.msra.mxu0 0
    %1311 = vmatprep.mubr.bf16.mxu0 0
    %1312 = vmatmul.mubr.bf16.gmra.mrb[0].mxu0 %v1182
    %v1313 = vpop.f32.mrb[0].mxu0
    %v1314 = vadd.f32 0.0, %v1313
    %v1315 = vpop.f32.mrb[0].mxu0
    %v1316 = vadd.f32 0.0, %v1315
    %v1317 = vpop.f32.mrb[0].mxu0
    %v1318 = vadd.f32 0.0, %v1317
    %v1319 = vpop.f32.mrb[0].mxu0
    %v1320 = vadd.f32 0.0, %v1319
    %1321 = vdwg.mxu0
    %1322 = vst [vmem:[#allocation2] sm:$0xff] %v1314
    %1323 = vst [vmem:[#allocation2 + $0x8] sm:$0xff] %v1316
    %1324 = vst [vmem:[#allocation2 + $0x10] sm:$0xff] %v1318
    %1325 = vst [vmem:[#allocation2 + $0x18] sm:$0xff] %v1320
    // Predicated region
    $region18: #{attention_ae_forward.1} parent=1 // pred_check
      _
    $region19: #{attention_ae_forward.1} parent=1 // pred_check_branch
      %1327 = sbr.rel (0) target = $region21
    $region20: #{attention_ae_forward.1} parent=1 // pred_region
      %s1329 = ssub.s32 512, 512
      %1330 = vsyncadd [#allocation3], %s1329
      %s1331 = sshll.u32 [#allocation2], 4
      %s1332 = int_to_ptr.vmem [resolvable:$true] %s1331
      %1337 = dma.vmem_to_hbm [thread:$0]  %s1332, 512, %s4, [#allocation3], 256, 256, 16
    $region21: #{attention_ae_forward.1} parent=1 // pred_fallthru
      _
    // Predicated region
    $region22: #{attention_ae_forward.1} parent=1 // pred_check
      _
    $region23: #{attention_ae_forward.1} parent=1 // pred_check_branch
      %1339 = sbr.rel (0) target = $region25
    $region24: #{attention_ae_forward.1} parent=1 // pred_region
      %1340 = dma.done [#allocation3], 512
    $region25: #{attention_ae_forward.1} parent=1 // pred_fallthru
      _
    %1341 = vsyncpa [#allocation3], 1

</llo_original>
